<compile_context>
chip_gen: v7x
topology: tpu7x:2x2x1
jax: 0.10.0
libtpu: 0.0.40
codegen_flags: <defaults>
</compile_context>

<pallas_src>
import math

import jax
import jax.numpy as jnp
from jax.experimental import pallas as pl
from jax.experimental.pallas import tpu as pltpu

_LANES = 512            # lane-dense last dim (multiple of 128)
_MAX_BLOCK_ROWS = 1024  # 1024 x 512 f32 = 2 MiB per tile


def _mix_kernel(mix_ref, fea1_ref, fea2_ref, out_ref):
    # mix_ref holds sigmoid(w) already (hoisted to the wrapper), f32 in SMEM.
    mix = mix_ref[0]
    f1 = fea1_ref[...].astype(jnp.float32)
    f2 = fea2_ref[...].astype(jnp.float32)
    # f1 * mix + f2 * (1 - mix) == f2 + (f1 - f2) * mix   (one mul, one add+sub)
    out_ref[...] = (f2 + (f1 - f2) * mix).astype(out_ref.dtype)


def mix_forward(fea1, fea2, w):
    """Pallas implementation of Mix.forward.

    fea1, fea2: same-shape arrays (e.g. NCHW float32/bfloat16, matching PyTorch).
    w:          raw (pre-sigmoid) scalar parameter, shape () or (1,).
    """
    assert fea1.shape == fea2.shape, "fea1/fea2 must have the same shape"
    assert fea1.dtype == fea2.dtype, "fea1/fea2 must have the same dtype"

    orig_shape = fea1.shape
    dtype = fea1.dtype
    total = int(math.prod(orig_shape))

    # ---- choose a lane-dense 2D tiling --------------------------------------
    rows = -(-total // _LANES)                       # ceil(total / LANES)
    if rows <= _MAX_BLOCK_ROWS:
        block_rows = max(8, ((rows + 7) // 8) * 8)   # sublane-aligned
    else:
        block_rows = _MAX_BLOCK_ROWS
    rows_padded = ((rows + block_rows - 1) // block_rows) * block_rows
    padded_total = rows_padded * _LANES
    grid_steps = rows_padded // block_rows

    def _flatten_pad(x):
        xf = x.reshape(-1)
        if padded_total != total:
            xf = jnp.pad(xf, (0, padded_total - total))
        return xf.reshape(rows_padded, _LANES)

    f1 = _flatten_pad(fea1)
    f2 = _flatten_pad(fea2)

    # Hoist sigmoid(w): compute once on the host-side graph, pass the scalar.
    mix = jax.nn.sigmoid(jnp.asarray(w, jnp.float32).reshape(-1)[:1])

    feat_spec = pl.BlockSpec((block_rows, _LANES), lambda i: (i, 0))

    out_flat = pl.pallas_call(
        _mix_kernel,
        out_shape=jax.ShapeDtypeStruct((rows_padded, _LANES), dtype),
        grid=(grid_steps,),
        in_specs=[
            pl.BlockSpec(memory_space=pltpu.SMEM),  # sigmoid(w) scalar
            feat_spec,
            feat_spec,
        ],
        out_specs=feat_spec,
        compiler_params=pltpu.CompilerParams(
            # Parallel axis: shards across v7x's 2 TensorCores when the tensor is
            # large enough to span >= 2 tiles; neutral on v5e/v6e.
            dimension_semantics=("parallel",),
            vmem_limit_bytes=32 * 1024 * 1024,
        ),
    )(mix, f1, f2)

    return out_flat.reshape(-1)[:total].reshape(orig_shape)


if __name__ == "__main__":
    # Deterministic parameter init, matching Mix(m=-0.8).
    w = jnp.array([-0.8], dtype=jnp.float32)

    key = jax.random.PRNGKey(0)
    k1, k2 = jax.random.split(key)
    shape = (2, 4, 16, 16)  # N, C, H, W
    fea1 = jax.random.normal(k1, shape, dtype=jnp.float32)
    fea2 = jax.random.normal(k2, shape, dtype=jnp.float32)

    out = mix_forward(fea1, fea2, w)
    out = jax.block_until_ready(out)

    # Reference check against plain JAX semantics of the PyTorch forward.
    mix_factor = jax.nn.sigmoid(w[0])
    ref = fea1 * mix_factor + fea2 * (1.0 - mix_factor)
    assert jnp.allclose(out, ref, atol=1e-6, rtol=1e-6), "mismatch vs reference"

    print("KERNEL_OK")
</pallas_src>

<mosaic_0001>
module attributes {stable_mosaic.version = 11 : i64} {
  func.func @_mix_kernel(%arg0: i32, %arg1: memref<1xf32, #tpu.memory_space<smem>>, %arg2: memref<8x512xf32, #tpu.memory_space<vmem>>, %arg3: memref<8x512xf32, #tpu.memory_space<vmem>>, %arg4: memref<8x512xf32, #tpu.memory_space<vmem>>) attributes {dimension_semantics = [#tpu.dimension_semantics<parallel>], iteration_bounds = array<i64: 1>, scalar_prefetch = 0 : i64, scratch_operands = 0 : i64, tpu.core_type = #tpu.core_type<tc>, window_params = [{transform_indices = @transform_0, window_bounds = array<i64: 1>}, {transform_indices = @transform_1, window_bounds = array<i64: 8, 512>}, {transform_indices = @transform_2, window_bounds = array<i64: 8, 512>}, {transform_indices = @transform_3, window_bounds = array<i64: 8, 512>}]} {
    %c0 = arith.constant 0 : index
    %0 = memref.load %arg1[%c0] : memref<1xf32, #tpu.memory_space<smem>>
    %c0_0 = arith.constant 0 : index
    %c0_1 = arith.constant 0 : index
    %1 = vector.load %arg2[%c0_0, %c0_1] : memref<8x512xf32, #tpu.memory_space<vmem>>, vector<8x512xf32>
    %c0_2 = arith.constant 0 : index
    %c0_3 = arith.constant 0 : index
    %2 = vector.load %arg3[%c0_2, %c0_3] : memref<8x512xf32, #tpu.memory_space<vmem>>, vector<8x512xf32>
    %3 = arith.subf %1, %2 : vector<8x512xf32>
    %4 = vector.broadcast %0 : f32 to vector<8x512xf32>
    %5 = arith.mulf %3, %4 : vector<8x512xf32>
    %6 = arith.addf %2, %5 : vector<8x512xf32>
    %c0_4 = arith.constant 0 : index
    %c0_5 = arith.constant 0 : index
    %7 = vector.load %arg4[%c0_4, %c0_5] : memref<8x512xf32, #tpu.memory_space<vmem>>, vector<8x512xf32>
    tpu.vector_store %arg4[%c0_4, %c0_5], %6 {strides = array<i32>} : memref<8x512xf32, #tpu.memory_space<vmem>>, vector<8x512xf32>,
    return
  }
  func.func @transform_0(%arg0: i32) -> i32 {
    %c0_i32 = arith.constant 0 : i32
    %c0_i32_0 = arith.constant 0 : i32
    return %c0_i32 : i32
  }
  func.func @transform_1(%arg0: i32) -> (i32, i32) {
    %c0_i32 = arith.constant 0 : i32
    %c0_i32_0 = arith.constant 0 : i32
    return %arg0, %c0_i32 : i32, i32
  }
  func.func @transform_2(%arg0: i32) -> (i32, i32) {
    %c0_i32 = arith.constant 0 : i32
    %c0_i32_0 = arith.constant 0 : i32
    return %arg0, %c0_i32 : i32, i32
  }
  func.func @transform_3(%arg0: i32) -> (i32, i32) {
    %c0_i32 = arith.constant 0 : i32
    %c0_i32_0 = arith.constant 0 : i32
    return %arg0, %c0_i32 : i32, i32
  }
}

</mosaic_0001>

<llo_original>
// kernel: tpu_custom_call.1
$region0: #{tpu_custom_call.1}
  #allocation0 [shape = 'u32[]', space=smem, size = 0x4, offset = 0x4, fixed_abs, tag = 'smem constant byte address 0x4 - core index']
  #allocation1 [shape = 'u32[144,128]{1,0:T(1,128)}', space=vmem, size = 0x12000, scoped, tag = 'internal scratch']
  #allocation2 [shape = 'f32[1]{0:T(128)S(6)}', space=smem, size = 0x200, scoped, tag = 'scoped memory for tpu_custom_call.1']
  %s0 = inlined_call_operand.<no memory space> [shape: f32[1], index: 0, kind: input, shape index: {}]
  %s1 = inlined_call_operand.hbm [shape: f32[8,512], index: 1, kind: input, shape index: {}]
  %s2 = inlined_call_operand.hbm [shape: f32[8,512], index: 2, kind: input, shape index: {}]
  %s3 = inlined_call_operand.hbm [shape: f32[8,512], index: 3, kind: output, shape index: {}]
  %s4 = sld [smem:[#allocation0]]
  $region30: #{tpu_custom_call.1} parent=0
    _
  %s6 = ssub.s32 1, %s4
  %s7 = scalar_select 0, %s6, %s4
  %8 = sst [smem:[#allocation2]] %s0
  $region1: #{tpu_custom_call.1} parent=0
    #allocation3 [shape = 'u8[16384]{0}', space=vmem, size = 0x4000, scoped, tag = 'input window, operand 1, single buffered']
    #allocation4 [shape = 's32[1]{0}', space=sflag, size = 0x4, scoped, tag = 'scoped memory for tpu_custom_call.1']
    #allocation5 [shape = 's32[1]{0}', space=sflag, size = 0x4, scoped, tag = 'scoped memory for tpu_custom_call.1']
    #allocation6 [shape = 'u8[16384]{0}', space=vmem, size = 0x4000, scoped, tag = 'input window, operand 2, single buffered']
    #allocation7 [shape = 's32[1]{0}', space=sflag, size = 0x4, scoped, tag = 'scoped memory for tpu_custom_call.1']
    #allocation8 [shape = 'u8[16384]{0}', space=vmem, size = 0x4000, scoped, tag = 'output window, operand 0, single buffered']
    %9 = vsyncpa [#allocation4], 0
    %10 = vsyncpa [#allocation7], 0
    %11 = vsyncpa [#allocation5], 0
    // Predicated region
    $region2: #{tpu_custom_call.1} parent=1 // pred_check
      _
    $region3: #{tpu_custom_call.1} parent=1 // pred_check_branch
      %13 = sbr.rel (0) target = $region5
    $region4: #{tpu_custom_call.1} parent=1 // pred_region
      _
    $region5: #{tpu_custom_call.1} parent=1 // pred_fallthru
      _
    // Predicated region
    $region6: #{tpu_custom_call.1} parent=1 // pred_check
      _
    $region7: #{tpu_custom_call.1} parent=1 // pred_check_branch
      %15 = sbr.rel (0) target = $region9
    $region8: #{tpu_custom_call.1} parent=1 // pred_region
      %s17 = ssub.s32 512, 512
      %18 = vsyncadd [#allocation4], %s17
      %s20 = sshll.u32 [#allocation3], 4
      %s21 = int_to_ptr.vmem [resolvable:$true] %s20
      %23 = dma.hbm_to_vmem [thread:$0]  %s1, 512, %s21, [#allocation4]
    $region9: #{tpu_custom_call.1} parent=1 // pred_fallthru
      _
    // Predicated region
    $region10: #{tpu_custom_call.1} parent=1 // pred_check
      _
    $region11: #{tpu_custom_call.1} parent=1 // pred_check_branch
      %25 = sbr.rel (0) target = $region13
    $region12: #{tpu_custom_call.1} parent=1 // pred_region
      %s27 = ssub.s32 512, 512
      %28 = vsyncadd [#allocation7], %s27
      %s30 = sshll.u32 [#allocation6], 4
      %s31 = int_to_ptr.vmem [resolvable:$true] %s30
      %33 = dma.hbm_to_vmem [thread:$0]  %s2, 512, %s31, [#allocation7]
    $region13: #{tpu_custom_call.1} parent=1 // pred_fallthru
      _
    // Predicated region
    $region14: #{tpu_custom_call.1} parent=1 // pred_check
      _
    $region15: #{tpu_custom_call.1} parent=1 // pred_check_branch
      %35 = sbr.rel (0) target = $region17
    $region16: #{tpu_custom_call.1} parent=1 // pred_region
      %36 = dma.done [#allocation4], 512
    $region17: #{tpu_custom_call.1} parent=1 // pred_fallthru
      _
    // Predicated region
    $region18: #{tpu_custom_call.1} parent=1 // pred_check
      _
    $region19: #{tpu_custom_call.1} parent=1 // pred_check_branch
      %38 = sbr.rel (0) target = $region21
    $region20: #{tpu_custom_call.1} parent=1 // pred_region
      %39 = dma.done [#allocation7], 512
    $region21: #{tpu_custom_call.1} parent=1 // pred_fallthru
      _
    %s40 = sld [smem:[#allocation2]]
    %v41 = vld [vmem:[#allocation3] sm:$0xff]
    %v42 = vld [vmem:[#allocation3 + $0x8] sm:$0xff]
    %v43 = vld [vmem:[#allocation3 + $0x10] sm:$0xff]
    %v44 = vld [vmem:[#allocation3 + $0x18] sm:$0xff]
    %v45 = vld [vmem:[#allocation6] sm:$0xff]
    %v46 = vld [vmem:[#allocation6 + $0x8] sm:$0xff]
    %v47 = vld [vmem:[#allocation6 + $0x10] sm:$0xff]
    %v48 = vld [vmem:[#allocation6 + $0x18] sm:$0xff]
    %v49 = vsub.f32 %v41, %v45
    %v50 = vsub.f32 %v42, %v46
    %v51 = vsub.f32 %v43, %v47
    %v52 = vsub.f32 %v44, %v48
    %v53 = vstv %s40
    %v54 = vmul.f32 %v49, %v53
    %v55 = vmul.f32 %v50, %v53
    %v56 = vmul.f32 %v51, %v53
    %v57 = vmul.f32 %v52, %v53
    %v58 = vadd.f32 %v45, %v54
    %v59 = vadd.f32 %v46, %v55
    %v60 = vadd.f32 %v47, %v56
    %v61 = vadd.f32 %v48, %v57
    %62 = vst [vmem:[#allocation8] sm:$0xff] %v58
    %63 = vst [vmem:[#allocation8 + $0x8] sm:$0xff] %v59
    %64 = vst [vmem:[#allocation8 + $0x10] sm:$0xff] %v60
    %65 = vst [vmem:[#allocation8 + $0x18] sm:$0xff] %v61
    // Predicated region
    $region22: #{tpu_custom_call.1} parent=1 // pred_check
      _
    $region23: #{tpu_custom_call.1} parent=1 // pred_check_branch
      %67 = sbr.rel (0) target = $region25
    $region24: #{tpu_custom_call.1} parent=1 // pred_region
      %s69 = ssub.s32 512, 512
      %70 = vsyncadd [#allocation5], %s69
      %s72 = sshll.u32 [#allocation8], 4
      %s73 = int_to_ptr.vmem [resolvable:$true] %s72
      %75 = dma.vmem_to_hbm [thread:$0]  %s73, 512, %s3, [#allocation5]
    $region25: #{tpu_custom_call.1} parent=1 // pred_fallthru
      _
    // Predicated region
    $region26: #{tpu_custom_call.1} parent=1 // pred_check
      _
    $region27: #{tpu_custom_call.1} parent=1 // pred_check_branch
      %77 = sbr.rel (0) target = $region29
    $region28: #{tpu_custom_call.1} parent=1 // pred_region
      %78 = dma.done [#allocation5], 512
    $region29: #{tpu_custom_call.1} parent=1 // pred_fallthru
      _
    %79 = vsyncpa [#allocation4], 1
    %80 = vsyncpa [#allocation7], 1
    %81 = vsyncpa [#allocation5], 1

</llo_original>
